<compile_context>
chip_gen: v6e
topology: v6e:2x2x1
jax: 0.10.0
libtpu: 0.0.40
codegen_flags: <defaults>
</compile_context>

<pallas_src>
import jax
import jax.numpy as jnp
import numpy as np
from jax import lax
from jax.experimental import pallas as pl
from jax.experimental.pallas import tpu as pltpu


def _ave_emb_kernel(tok_ref, emb_ref, out_ref, acc_ref):
    """One grid step: one (TB-row batch tile) x (TV-row vocab chunk).

    tok_ref : VMEM (TB, L)  int32   token ids for this batch tile
    emb_ref : VMEM (TV, E)  f32     vocab chunk of the embedding table
    out_ref : VMEM (TB, E)  f32     averaged embeddings (written at last chunk)
    acc_ref : VMEM (TB, E)  f32     running sum over vocab chunks
    """
    k = pl.program_id(1)
    nk = pl.num_programs(1)
    TB, L = tok_ref.shape
    TV, _ = emb_ref.shape

    @pl.when(k == 0)
    def _():
        acc_ref[...] = jnp.zeros_like(acc_ref)

    tok = tok_ref[...]                                              # (TB, L) int32

    # counts[b, v] = #{ l : tok[b, l] == k*TV + v }   (built on the VPU)
    col = lax.broadcasted_iota(jnp.int32, (TB, TV), 1) + k * TV     # (TB, TV)
    counts = jnp.zeros((TB, TV), jnp.float32)
    for l in range(L):                                              # L is small & static
        counts = counts + (tok[:, l:l + 1] == col).astype(jnp.float32)

    # One MXU matmul replaces TB*L dependent row gathers.
    acc_ref[...] += jnp.dot(
        counts, emb_ref[...],
        preferred_element_type=jnp.float32,
        precision=lax.Precision.HIGHEST,
    )

    @pl.when(k == nk - 1)
    def _():
        # Divisor: number of NON-zero tokens per row (token 0 still summed above).
        cnt = (tok != 0).sum(axis=1, keepdims=True).astype(jnp.float32)  # (TB, 1)
        out_ref[...] = (acc_ref[...] * pl.reciprocal(cnt, approx=False)).astype(
            out_ref.dtype)


def _round_up(x, m):
    return ((x + m - 1) // m) * m


def ave_emb_encoder(input_x, emb_table, *, tb=128, tv=512):
    """input_x: (B, L) int token ids; emb_table: (V, E) f32 -> (B, E) f32."""
    input_x = input_x.astype(jnp.int32)
    emb_table = emb_table.astype(jnp.float32)
    B, L = input_x.shape
    V, E = emb_table.shape

    # Tile sizes: batch tile multiple of 8 sublanes, vocab chunk multiple of 8.
    tb = min(tb, _round_up(B, 8))
    tv = min(tv, _round_up(V, 8))
    B_pad = _round_up(B, tb)
    V_pad = _round_up(V, tv)

    if B_pad != B:
        input_x = jnp.pad(input_x, ((0, B_pad - B), (0, 0)))        # zero-token rows
    if V_pad != V:
        emb_table = jnp.pad(emb_table, ((0, V_pad - V), (0, 0)))    # zero embeddings

    grid = (B_pad // tb, V_pad // tv)                               # (batch, vocab)

    out = pl.pallas_call(
        _ave_emb_kernel,
        out_shape=jax.ShapeDtypeStruct((B_pad, E), jnp.float32),
        grid_spec=pltpu.PrefetchScalarGridSpec(
            num_scalar_prefetch=0,
            grid=grid,
            in_specs=[
                # Tokens: same block across the vocab axis -> no re-DMA per chunk.
                pl.BlockSpec((tb, L), lambda i, k: (i, 0)),
                # Embedding table: one vocab chunk per k step.
                pl.BlockSpec((tv, E), lambda i, k: (k, 0)),
            ],
            out_specs=pl.BlockSpec((tb, E), lambda i, k: (i, 0)),
            scratch_shapes=[pltpu.VMEM((tb, E), jnp.float32)],
        ),
        compiler_params=pltpu.CompilerParams(
            # Batch rows independent -> shard across TensorCores (v7x); vocab is
            # the reduction axis (accumulator resident) -> "arbitrary", last.
            dimension_semantics=("parallel", "arbitrary"),
            vmem_limit_bytes=32 * 1024 * 1024,
        ),
    )(input_x, emb_table)
    return out[:B]


def _reference(input_x, emb_table):
    inputs_len = (input_x != 0).sum(axis=1, keepdims=True).astype(jnp.float32)
    x_wrd = emb_table[input_x]                      # (B, L, E)
    return x_wrd.sum(axis=1) / inputs_len


if __name__ == "__main__":
    # Small, deterministic problem.
    B, L = 8, 16
    VOCAB, EMB = 32, 128

    key = jax.random.PRNGKey(0)
    k_emb, k_tok = jax.random.split(key)

    # xavier_uniform_ init of the embedding weight: U(-a, a), a = sqrt(6/(V+E)).
    bound = float(np.sqrt(6.0 / (VOCAB + EMB)))
    emb_table = jax.random.uniform(
        k_emb, (VOCAB, EMB), dtype=jnp.float32, minval=-bound, maxval=bound)

    # Token ids with some zeros (padding) but every row has >= 1 non-zero token.
    # (An all-zero row would divide by zero -> inf, same as the PyTorch module.)
    input_x = jax.random.randint(k_tok, (B, L), 0, VOCAB, dtype=jnp.int32)
    input_x = input_x.at[:, 0].set(jnp.maximum(input_x[:, 0], 1))

    out = ave_emb_encoder(input_x, emb_table)
    out = jax.block_until_ready(out)

    ref = _reference(input_x, emb_table)
    np.testing.assert_allclose(np.asarray(out), np.asarray(ref), rtol=1e-5, atol=1e-5)

    print("KERNEL_OK")
</pallas_src>

<mosaic_0001>
module attributes {stable_mosaic.version = 11 : i64} {
  func.func @_ave_emb_kernel(%arg0: i32, %arg1: i32, %arg2: memref<8x16xi32, #tpu.memory_space<vmem>>, %arg3: memref<32x128xf32, #tpu.memory_space<vmem>>, %arg4: memref<8x128xf32, #tpu.memory_space<vmem>>, %arg5: memref<8x128xf32, #tpu.memory_space<vmem>>) attributes {dimension_semantics = [#tpu.dimension_semantics<parallel>, #tpu.dimension_semantics<arbitrary>], iteration_bounds = array<i64: 1, 1>, scalar_prefetch = 0 : i64, scratch_operands = 1 : i64, tpu.core_type = #tpu.core_type<tc>, window_params = [{transform_indices = @transform_0, window_bounds = array<i64: 8, 16>}, {transform_indices = @transform_1, window_bounds = array<i64: 32, 128>}, {transform_indices = @transform_2, window_bounds = array<i64: 8, 128>}]} {
    %c0_i32 = arith.constant 0 : i32
    %0 = arith.cmpi eq, %arg1, %c0_i32 : i32
    %1 = arith.extui %0 : i1 to i32
    %c0_i32_0 = arith.constant 0 : i32
    %2 = arith.cmpi ne, %1, %c0_i32_0 : i32
    scf.if %2 {
      %cst_11 = arith.constant 0.000000e+00 : f32
      %113 = vector.broadcast %cst_11 : f32 to vector<8x128xf32>
      %c0_12 = arith.constant 0 : index
      %c0_13 = arith.constant 0 : index
      %114 = vector.load %arg5[%c0_12, %c0_13] : memref<8x128xf32, #tpu.memory_space<vmem>>, vector<8x128xf32>
      tpu.vector_store %arg5[%c0_12, %c0_13], %113 {strides = array<i32>} : memref<8x128xf32, #tpu.memory_space<vmem>>, vector<8x128xf32>,
    } else {
    }
    %c0 = arith.constant 0 : index
    %c0_1 = arith.constant 0 : index
    %3 = vector.load %arg2[%c0, %c0_1] : memref<8x16xi32, #tpu.memory_space<vmem>>, vector<8x16xi32>
    %4 = tpu.iota {dimensions = array<i32: 1>} : vector<8x32xi32>
    %c32_i32 = arith.constant 32 : i32
    %5 = arith.muli %arg1, %c32_i32 : i32
    %6 = vector.broadcast %5 : i32 to vector<8x32xi32>
    %7 = arith.addi %4, %6 : vector<8x32xi32>
    %cst = arith.constant 0.000000e+00 : f32
    %8 = vector.broadcast %cst : f32 to vector<8x32xf32>
    %9 = vector.extract_strided_slice %3 {offsets = [0, 0], sizes = [8, 1], strides = [1, 1]} : vector<8x16xi32> to vector<8x1xi32>
    %10 = vector.broadcast %9 : vector<8x1xi32> to vector<8x32xi32>
    %11 = arith.cmpi eq, %10, %7 : vector<8x32xi32>
    %12 = arith.extui %11 : vector<8x32xi1> to vector<8x32xi32>
    %13 = arith.sitofp %12 : vector<8x32xi32> to vector<8x32xf32>
    %14 = arith.addf %8, %13 : vector<8x32xf32>
    %15 = vector.extract_strided_slice %3 {offsets = [0, 1], sizes = [8, 1], strides = [1, 1]} : vector<8x16xi32> to vector<8x1xi32>
    %16 = vector.broadcast %15 : vector<8x1xi32> to vector<8x32xi32>
    %17 = arith.cmpi eq, %16, %7 : vector<8x32xi32>
    %18 = arith.extui %17 : vector<8x32xi1> to vector<8x32xi32>
    %19 = arith.sitofp %18 : vector<8x32xi32> to vector<8x32xf32>
    %20 = arith.addf %14, %19 : vector<8x32xf32>
    %21 = vector.extract_strided_slice %3 {offsets = [0, 2], sizes = [8, 1], strides = [1, 1]} : vector<8x16xi32> to vector<8x1xi32>
    %22 = vector.broadcast %21 : vector<8x1xi32> to vector<8x32xi32>
    %23 = arith.cmpi eq, %22, %7 : vector<8x32xi32>
    %24 = arith.extui %23 : vector<8x32xi1> to vector<8x32xi32>
    %25 = arith.sitofp %24 : vector<8x32xi32> to vector<8x32xf32>
    %26 = arith.addf %20, %25 : vector<8x32xf32>
    %27 = vector.extract_strided_slice %3 {offsets = [0, 3], sizes = [8, 1], strides = [1, 1]} : vector<8x16xi32> to vector<8x1xi32>
    %28 = vector.broadcast %27 : vector<8x1xi32> to vector<8x32xi32>
    %29 = arith.cmpi eq, %28, %7 : vector<8x32xi32>
    %30 = arith.extui %29 : vector<8x32xi1> to vector<8x32xi32>
    %31 = arith.sitofp %30 : vector<8x32xi32> to vector<8x32xf32>
    %32 = arith.addf %26, %31 : vector<8x32xf32>
    %33 = vector.extract_strided_slice %3 {offsets = [0, 4], sizes = [8, 1], strides = [1, 1]} : vector<8x16xi32> to vector<8x1xi32>
    %34 = vector.broadcast %33 : vector<8x1xi32> to vector<8x32xi32>
    %35 = arith.cmpi eq, %34, %7 : vector<8x32xi32>
    %36 = arith.extui %35 : vector<8x32xi1> to vector<8x32xi32>
    %37 = arith.sitofp %36 : vector<8x32xi32> to vector<8x32xf32>
    %38 = arith.addf %32, %37 : vector<8x32xf32>
    %39 = vector.extract_strided_slice %3 {offsets = [0, 5], sizes = [8, 1], strides = [1, 1]} : vector<8x16xi32> to vector<8x1xi32>
    %40 = vector.broadcast %39 : vector<8x1xi32> to vector<8x32xi32>
    %41 = arith.cmpi eq, %40, %7 : vector<8x32xi32>
    %42 = arith.extui %41 : vector<8x32xi1> to vector<8x32xi32>
    %43 = arith.sitofp %42 : vector<8x32xi32> to vector<8x32xf32>
    %44 = arith.addf %38, %43 : vector<8x32xf32>
    %45 = vector.extract_strided_slice %3 {offsets = [0, 6], sizes = [8, 1], strides = [1, 1]} : vector<8x16xi32> to vector<8x1xi32>
    %46 = vector.broadcast %45 : vector<8x1xi32> to vector<8x32xi32>
    %47 = arith.cmpi eq, %46, %7 : vector<8x32xi32>
    %48 = arith.extui %47 : vector<8x32xi1> to vector<8x32xi32>
    %49 = arith.sitofp %48 : vector<8x32xi32> to vector<8x32xf32>
    %50 = arith.addf %44, %49 : vector<8x32xf32>
    %51 = vector.extract_strided_slice %3 {offsets = [0, 7], sizes = [8, 1], strides = [1, 1]} : vector<8x16xi32> to vector<8x1xi32>
    %52 = vector.broadcast %51 : vector<8x1xi32> to vector<8x32xi32>
    %53 = arith.cmpi eq, %52, %7 : vector<8x32xi32>
    %54 = arith.extui %53 : vector<8x32xi1> to vector<8x32xi32>
    %55 = arith.sitofp %54 : vector<8x32xi32> to vector<8x32xf32>
    %56 = arith.addf %50, %55 : vector<8x32xf32>
    %57 = vector.extract_strided_slice %3 {offsets = [0, 8], sizes = [8, 1], strides = [1, 1]} : vector<8x16xi32> to vector<8x1xi32>
    %58 = vector.broadcast %57 : vector<8x1xi32> to vector<8x32xi32>
    %59 = arith.cmpi eq, %58, %7 : vector<8x32xi32>
    %60 = arith.extui %59 : vector<8x32xi1> to vector<8x32xi32>
    %61 = arith.sitofp %60 : vector<8x32xi32> to vector<8x32xf32>
    %62 = arith.addf %56, %61 : vector<8x32xf32>
    %63 = vector.extract_strided_slice %3 {offsets = [0, 9], sizes = [8, 1], strides = [1, 1]} : vector<8x16xi32> to vector<8x1xi32>
    %64 = vector.broadcast %63 : vector<8x1xi32> to vector<8x32xi32>
    %65 = arith.cmpi eq, %64, %7 : vector<8x32xi32>
    %66 = arith.extui %65 : vector<8x32xi1> to vector<8x32xi32>
    %67 = arith.sitofp %66 : vector<8x32xi32> to vector<8x32xf32>
    %68 = arith.addf %62, %67 : vector<8x32xf32>
    %69 = vector.extract_strided_slice %3 {offsets = [0, 10], sizes = [8, 1], strides = [1, 1]} : vector<8x16xi32> to vector<8x1xi32>
    %70 = vector.broadcast %69 : vector<8x1xi32> to vector<8x32xi32>
    %71 = arith.cmpi eq, %70, %7 : vector<8x32xi32>
    %72 = arith.extui %71 : vector<8x32xi1> to vector<8x32xi32>
    %73 = arith.sitofp %72 : vector<8x32xi32> to vector<8x32xf32>
    %74 = arith.addf %68, %73 : vector<8x32xf32>
    %75 = vector.extract_strided_slice %3 {offsets = [0, 11], sizes = [8, 1], strides = [1, 1]} : vector<8x16xi32> to vector<8x1xi32>
    %76 = vector.broadcast %75 : vector<8x1xi32> to vector<8x32xi32>
    %77 = arith.cmpi eq, %76, %7 : vector<8x32xi32>
    %78 = arith.extui %77 : vector<8x32xi1> to vector<8x32xi32>
    %79 = arith.sitofp %78 : vector<8x32xi32> to vector<8x32xf32>
    %80 = arith.addf %74, %79 : vector<8x32xf32>
    %81 = vector.extract_strided_slice %3 {offsets = [0, 12], sizes = [8, 1], strides = [1, 1]} : vector<8x16xi32> to vector<8x1xi32>
    %82 = vector.broadcast %81 : vector<8x1xi32> to vector<8x32xi32>
    %83 = arith.cmpi eq, %82, %7 : vector<8x32xi32>
    %84 = arith.extui %83 : vector<8x32xi1> to vector<8x32xi32>
    %85 = arith.sitofp %84 : vector<8x32xi32> to vector<8x32xf32>
    %86 = arith.addf %80, %85 : vector<8x32xf32>
    %87 = vector.extract_strided_slice %3 {offsets = [0, 13], sizes = [8, 1], strides = [1, 1]} : vector<8x16xi32> to vector<8x1xi32>
    %88 = vector.broadcast %87 : vector<8x1xi32> to vector<8x32xi32>
    %89 = arith.cmpi eq, %88, %7 : vector<8x32xi32>
    %90 = arith.extui %89 : vector<8x32xi1> to vector<8x32xi32>
    %91 = arith.sitofp %90 : vector<8x32xi32> to vector<8x32xf32>
    %92 = arith.addf %86, %91 : vector<8x32xf32>
    %93 = vector.extract_strided_slice %3 {offsets = [0, 14], sizes = [8, 1], strides = [1, 1]} : vector<8x16xi32> to vector<8x1xi32>
    %94 = vector.broadcast %93 : vector<8x1xi32> to vector<8x32xi32>
    %95 = arith.cmpi eq, %94, %7 : vector<8x32xi32>
    %96 = arith.extui %95 : vector<8x32xi1> to vector<8x32xi32>
    %97 = arith.sitofp %96 : vector<8x32xi32> to vector<8x32xf32>
    %98 = arith.addf %92, %97 : vector<8x32xf32>
    %99 = vector.extract_strided_slice %3 {offsets = [0, 15], sizes = [8, 1], strides = [1, 1]} : vector<8x16xi32> to vector<8x1xi32>
    %100 = vector.broadcast %99 : vector<8x1xi32> to vector<8x32xi32>
    %101 = arith.cmpi eq, %100, %7 : vector<8x32xi32>
    %102 = arith.extui %101 : vector<8x32xi1> to vector<8x32xi32>
    %103 = arith.sitofp %102 : vector<8x32xi32> to vector<8x32xf32>
    %104 = arith.addf %98, %103 : vector<8x32xf32>
    %c0_2 = arith.constant 0 : index
    %c0_3 = arith.constant 0 : index
    %105 = vector.load %arg5[%c0_2, %c0_3] : memref<8x128xf32, #tpu.memory_space<vmem>>, vector<8x128xf32>
    %c0_4 = arith.constant 0 : index
    %c0_5 = arith.constant 0 : index
    %106 = vector.load %arg3[%c0_4, %c0_5] : memref<32x128xf32, #tpu.memory_space<vmem>>, vector<32x128xf32>
    %cst_6 = arith.constant dense<0.000000e+00> : vector<8x128xf32>
    %107 = tpu.matmul %104, %106, %cst_6 {dimension_numbers = #tpu.dot_dimension_numbers<[1], [0], [0], [1], [0, 0, 1, 1], [], []>, precision = #tpu.contract_precision<fp32>} : vector<8x32xf32>, vector<32x128xf32>, vector<8x128xf32> -> vector<8x128xf32>
    %108 = arith.addf %105, %107 : vector<8x128xf32>
    %c0_7 = arith.constant 0 : index
    %c0_8 = arith.constant 0 : index
    %109 = vector.load %arg5[%c0_7, %c0_8] : memref<8x128xf32, #tpu.memory_space<vmem>>, vector<8x128xf32>
    tpu.vector_store %arg5[%c0_7, %c0_8], %108 {strides = array<i32>} : memref<8x128xf32, #tpu.memory_space<vmem>>, vector<8x128xf32>,
    %c0_i32_9 = arith.constant 0 : i32
    %110 = arith.cmpi eq, %arg1, %c0_i32_9 : i32
    %111 = arith.extui %110 : i1 to i32
    %c0_i32_10 = arith.constant 0 : i32
    %112 = arith.cmpi ne, %111, %c0_i32_10 : i32
    scf.if %112 {
      %c0_i32_11 = arith.constant 0 : i32
      %113 = vector.broadcast %c0_i32_11 : i32 to vector<8x16xi32>
      %114 = arith.cmpi ne, %3, %113 : vector<8x16xi32>
      %115 = arith.extui %114 : vector<8x16xi1> to vector<8x16xi32>
      %cst_12 = arith.constant dense<0> : vector<8xi32>
      %116 = vector.multi_reduction <add>, %115, %cst_12 [1] : vector<8x16xi32> to vector<8xi32>
      %117 = vector.shape_cast %116 : vector<8xi32> to vector<8x1xi32>
      %118 = arith.sitofp %117 : vector<8x1xi32> to vector<8x1xf32>
      %c0_13 = arith.constant 0 : index
      %c0_14 = arith.constant 0 : index
      %119 = vector.load %arg5[%c0_13, %c0_14] : memref<8x128xf32, #tpu.memory_space<vmem>>, vector<8x128xf32>
      %120 = tpu.reciprocal %118 : vector<8x1xf32> -> vector<8x1xf32>
      %121 = vector.broadcast %120 : vector<8x1xf32> to vector<8x128xf32>
      %122 = arith.mulf %119, %121 : vector<8x128xf32>
      %c0_15 = arith.constant 0 : index
      %c0_16 = arith.constant 0 : index
      %123 = vector.load %arg4[%c0_15, %c0_16] : memref<8x128xf32, #tpu.memory_space<vmem>>, vector<8x128xf32>
      tpu.vector_store %arg4[%c0_15, %c0_16], %122 {strides = array<i32>} : memref<8x128xf32, #tpu.memory_space<vmem>>, vector<8x128xf32>,
    } else {
    }
    return
  }
  func.func @transform_0(%arg0: i32, %arg1: i32) -> (i32, i32) {
    %c0_i32 = arith.constant 0 : i32
    %c0_i32_0 = arith.constant 0 : i32
    return %arg0, %c0_i32 : i32, i32
  }
  func.func @transform_1(%arg0: i32, %arg1: i32) -> (i32, i32) {
    %c0_i32 = arith.constant 0 : i32
    %c0_i32_0 = arith.constant 0 : i32
    return %arg1, %c0_i32 : i32, i32
  }
  func.func @transform_2(%arg0: i32, %arg1: i32) -> (i32, i32) {
    %c0_i32 = arith.constant 0 : i32
    %c0_i32_0 = arith.constant 0 : i32
    return %arg0, %c0_i32 : i32, i32
  }
}

</mosaic_0001>

<llo_original>
// kernel: tpu_custom_call.1
$region0: #{tpu_custom_call.1}
  #allocation0 [shape = 'u32[]', space=smem, size = 0x4, offset = 0x4, fixed_abs, tag = 'smem constant byte address 0x4 - core index']
  #allocation1 [shape = 'u32[144,128]{1,0:T(1,128)}', space=vmem, size = 0x12000, scoped, tag = 'internal scratch']
  #allocation2 [shape = 'f32[8,128]{1,0:T(8,128)}', space=vmem, size = 0x1000, scoped, tag = 'scratch operand']
  %s0 = inlined_call_operand.hbm [shape: s32[8,16], index: 0, kind: input, shape index: {}]
  %s1 = inlined_call_operand.hbm [shape: f32[32,128], index: 1, kind: input, shape index: {}]
  %s2 = inlined_call_operand.hbm [shape: f32[8,128], index: 2, kind: output, shape index: {}]
  %s3 = sld [smem:[#allocation0]]
  $region34: #{tpu_custom_call.1} parent=0
    _
  %s5 = ssub.s32 1, %s3
  %s6 = scalar_select 0, %s5, %s3
  $region1: #{tpu_custom_call.1} parent=0
    #allocation3 [shape = 'u8[4096]{0}', space=vmem, size = 0x1000, scoped, tag = 'input window, operand 0, single buffered']
    #allocation4 [shape = 's32[1]{0}', space=sflag, size = 0x4, scoped, tag = 'scoped memory for tpu_custom_call.1']
    #allocation5 [shape = 's32[1]{0}', space=sflag, size = 0x4, scoped, tag = 'scoped memory for tpu_custom_call.1']
    #allocation6 [shape = 'u8[16384]{0}', space=vmem, size = 0x4000, scoped, tag = 'input window, operand 1, single buffered']
    #allocation7 [shape = 's32[1]{0}', space=sflag, size = 0x4, scoped, tag = 'scoped memory for tpu_custom_call.1']
    #allocation8 [shape = 'u8[4096]{0}', space=vmem, size = 0x1000, scoped, tag = 'output window, operand 0, single buffered']
    %7 = vsyncpa [#allocation4], 0
    %8 = vsyncpa [#allocation7], 0
    %9 = vsyncpa [#allocation5], 0
    // Predicated region
    $region2: #{tpu_custom_call.1} parent=1 // pred_check
      _
    $region3: #{tpu_custom_call.1} parent=1 // pred_check_branch
      %11 = sbr.rel (0) target = $region5
    $region4: #{tpu_custom_call.1} parent=1 // pred_region
      %s13 = ssub.s32 128, 128
      %14 = vsyncadd [#allocation4], %s13
      %s16 = sshll.u32 [#allocation3], 4
      %s17 = int_to_ptr.vmem [resolvable:$true] %s16
      %19 = dma.hbm_to_vmem [thread:$0]  %s0, 128, %s17, [#allocation4]
    $region5: #{tpu_custom_call.1} parent=1 // pred_fallthru
      _
    // Predicated region
    $region6: #{tpu_custom_call.1} parent=1 // pred_check
      _
    $region7: #{tpu_custom_call.1} parent=1 // pred_check_branch
      %21 = sbr.rel (0) target = $region9
    $region8: #{tpu_custom_call.1} parent=1 // pred_region
      %s23 = ssub.s32 512, 512
      %24 = vsyncadd [#allocation7], %s23
      %s25 = sshll.u32 [#allocation6], 4
      %s26 = int_to_ptr.vmem [resolvable:$true] %s25
      %31 = dma.hbm_to_vmem [thread:$0]  %s1, 512, %s26, [#allocation7], 128, 128, 8
    $region9: #{tpu_custom_call.1} parent=1 // pred_fallthru
      _
    // Predicated region
    $region10: #{tpu_custom_call.1} parent=1 // pred_check
      _
    $region11: #{tpu_custom_call.1} parent=1 // pred_check_branch
      %33 = sbr.rel (0) target = $region13
    $region12: #{tpu_custom_call.1} parent=1 // pred_region
      %34 = dma.done [#allocation4], 128
    $region13: #{tpu_custom_call.1} parent=1 // pred_fallthru
      _
    // Predicated region
    $region14: #{tpu_custom_call.1} parent=1 // pred_check
      _
    $region15: #{tpu_custom_call.1} parent=1 // pred_check_branch
      %36 = sbr.rel (0) target = $region17
    $region16: #{tpu_custom_call.1} parent=1 // pred_region
      %37 = dma.done [#allocation7], 512
    $region17: #{tpu_custom_call.1} parent=1 // pred_fallthru
      _
    %p38 = scmp.eq.s32.totalorder 0, 0
    // Predicated region
    $region18: #{tpu_custom_call.1} parent=1 // pred_check
      %p39 = pneg %p38
    $region19: #{tpu_custom_call.1} parent=1 // pred_check_branch
      %41 = sbr.rel (%p39) target = $region21
    $region20: #{tpu_custom_call.1} parent=1 // pred_region
      %42 = vst [vmem:[#allocation2] sm:$0xff] 0.0
    $region21: #{tpu_custom_call.1} parent=1 // pred_fallthru
      _
    %v43 = vld [vmem:[#allocation3] sm:$0xff]
    %v44 = vlaneseq
    %v45 = vand.u32 %v44, 127
    %s46 = smul.u32 0, 32
    %v47 = vstv %s46
    %v48 = vadd.s32 %v45, %v47
    %49 = vset.pattern.permute.xlu0 0
    %50 = vperm.xlu0 %49, %v43
    %v51 = vpop.permute.xlu0 %50
    %vm52 = vcmp.eq.s32.totalorder %v51, %v48
    %v53 = vsel %vm52, 1, 0
    %v54 = vcvt.s32.f32 %v53
    %v55 = vadd.f32 %v54, 0.0
    %56 = vset.pattern.permute.xlu0 1
    %57 = vperm.xlu0 %56, %v43
    %v58 = vpop.permute.xlu0 %57
    %vm59 = vcmp.eq.s32.totalorder %v58, %v48
    %v60 = vsel %vm59, 1, 0
    %v61 = vcvt.s32.f32 %v60
    %v62 = vadd.f32 %v55, %v61
    %63 = vset.pattern.permute.xlu0 2
    %64 = vperm.xlu0 %63, %v43
    %v65 = vpop.permute.xlu0 %64
    %vm66 = vcmp.eq.s32.totalorder %v65, %v48
    %v67 = vsel %vm66, 1, 0
    %v68 = vcvt.s32.f32 %v67
    %v69 = vadd.f32 %v62, %v68
    %70 = vset.pattern.permute.xlu0 3
    %71 = vperm.xlu0 %70, %v43
    %v72 = vpop.permute.xlu0 %71
    %vm73 = vcmp.eq.s32.totalorder %v72, %v48
    %v74 = vsel %vm73, 1, 0
    %v75 = vcvt.s32.f32 %v74
    %v76 = vadd.f32 %v69, %v75
    %77 = vset.pattern.permute.xlu0 4
    %78 = vperm.xlu0 %77, %v43
    %v79 = vpop.permute.xlu0 %78
    %vm80 = vcmp.eq.s32.totalorder %v79, %v48
    %v81 = vsel %vm80, 1, 0
    %v82 = vcvt.s32.f32 %v81
    %v83 = vadd.f32 %v76, %v82
    %84 = vset.pattern.permute.xlu0 5
    %85 = vperm.xlu0 %84, %v43
    %v86 = vpop.permute.xlu0 %85
    %vm87 = vcmp.eq.s32.totalorder %v86, %v48
    %v88 = vsel %vm87, 1, 0
    %v89 = vcvt.s32.f32 %v88
    %v90 = vadd.f32 %v83, %v89
    %91 = vset.pattern.permute.xlu0 6
    %92 = vperm.xlu0 %91, %v43
    %v93 = vpop.permute.xlu0 %92
    %vm94 = vcmp.eq.s32.totalorder %v93, %v48
    %v95 = vsel %vm94, 1, 0
    %v96 = vcvt.s32.f32 %v95
    %v97 = vadd.f32 %v90, %v96
    %98 = vset.pattern.permute.xlu0 7
    %99 = vperm.xlu0 %98, %v43
    %v100 = vpop.permute.xlu0 %99
    %vm101 = vcmp.eq.s32.totalorder %v100, %v48
    %v102 = vsel %vm101, 1, 0
    %v103 = vcvt.s32.f32 %v102
    %v104 = vadd.f32 %v97, %v103
    %105 = vset.pattern.permute.xlu0 8
    %106 = vperm.xlu0 %105, %v43
    %v107 = vpop.permute.xlu0 %106
    %vm108 = vcmp.eq.s32.totalorder %v107, %v48
    %v109 = vsel %vm108, 1, 0
    %v110 = vcvt.s32.f32 %v109
    %v111 = vadd.f32 %v104, %v110
    %112 = vset.pattern.permute.xlu0 9
    %113 = vperm.xlu0 %112, %v43
    %v114 = vpop.permute.xlu0 %113
    %vm115 = vcmp.eq.s32.totalorder %v114, %v48
    %v116 = vsel %vm115, 1, 0
    %v117 = vcvt.s32.f32 %v116
    %v118 = vadd.f32 %v111, %v117
    %119 = vset.pattern.permute.xlu0 10
    %120 = vperm.xlu0 %119, %v43
    %v121 = vpop.permute.xlu0 %120
    %vm122 = vcmp.eq.s32.totalorder %v121, %v48
    %v123 = vsel %vm122, 1, 0
    %v124 = vcvt.s32.f32 %v123
    %v125 = vadd.f32 %v118, %v124
    %126 = vset.pattern.permute.xlu0 11
    %127 = vperm.xlu0 %126, %v43
    %v128 = vpop.permute.xlu0 %127
    %vm129 = vcmp.eq.s32.totalorder %v128, %v48
    %v130 = vsel %vm129, 1, 0
    %v131 = vcvt.s32.f32 %v130
    %v132 = vadd.f32 %v125, %v131
    %133 = vset.pattern.permute.xlu0 12
    %134 = vperm.xlu0 %133, %v43
    %v135 = vpop.permute.xlu0 %134
    %vm136 = vcmp.eq.s32.totalorder %v135, %v48
    %v137 = vsel %vm136, 1, 0
    %v138 = vcvt.s32.f32 %v137
    %v139 = vadd.f32 %v132, %v138
    %140 = vset.pattern.permute.xlu0 13
    %141 = vperm.xlu0 %140, %v43
    %v142 = vpop.permute.xlu0 %141
    %vm143 = vcmp.eq.s32.totalorder %v142, %v48
    %v144 = vsel %vm143, 1, 0
    %v145 = vcvt.s32.f32 %v144
    %v146 = vadd.f32 %v139, %v145
    %147 = vset.pattern.permute.xlu0 14
    %148 = vperm.xlu0 %147, %v43
    %v149 = vpop.permute.xlu0 %148
    %vm150 = vcmp.eq.s32.totalorder %v149, %v48
    %v151 = vsel %vm150, 1, 0
    %v152 = vcvt.s32.f32 %v151
    %v153 = vadd.f32 %v146, %v152
    %154 = vset.pattern.permute.xlu0 15
    %155 = vperm.xlu0 %154, %v43
    %v156 = vpop.permute.xlu0 %155
    %vm157 = vcmp.eq.s32.totalorder %v156, %v48
    %v158 = vsel %vm157, 1, 0
    %v159 = vcvt.s32.f32 %v158
    %v160 = vadd.f32 %v153, %v159
    %v161 = vld [vmem:[#allocation2] sm:$0xff]
    %v162 = vld [vmem:[#allocation6] sm:$0xff]
    %v163 = vld [vmem:[#allocation6 + $0x8] sm:$0xff]
    %v164 = vld [vmem:[#allocation6 + $0x10] sm:$0xff]
    %v165 = vld [vmem:[#allocation6 + $0x18] sm:$0xff]
    %vm166 = vcmask 261120
    %v168 = vsel %vm166, %v160, 0
    %170 = vmatprep.subr.mxu0 0.0
    %171 = vmatpush1.msra.mxu0 0.0
    %172 = vmatprep.subr.mxu0 0.0
    %173 = vmatpush1.msra.mxu0 0.0
    %174 = vmatprep.subr.mxu0 0.0
    %175 = vmatpush1.msra.mxu0 0.0
    %176 = vmatprep.subr.mxu0 0.0
    %177 = vmatpush1.msra.mxu0 0.0
    %178 = vmatprep.subr.mxu0 0.0
    %179 = vmatpush1.msra.mxu0 0.0
    %180 = vmatprep.subr.mxu0 0.0
    %181 = vmatpush1.msra.mxu0 0.0
    %182 = vmatprep.subr.mxu0 0.0
    %183 = vmatpush1.msra.mxu0 0.0
    %184 = vmatprep.subr.mxu0 0.0
    %185 = vmatpush1.msra.mxu0 0.0
    %186 = vmatprep.subr.mxu0 0.0
    %187 = vmatpush1.msra.mxu0 0.0
    %188 = vmatprep.subr.mxu0 0.0
    %189 = vmatpush1.msra.mxu0 0.0
    %190 = vmatprep.subr.mxu0 0.0
    %191 = vmatpush1.msra.mxu0 0.0
    %192 = vmatprep.subr.mxu0 0.0
    %193 = vmatpush1.msra.mxu0 0.0
    %194 = vmatprep.subr.mxu0 0.0
    %v195 = vand.u32 %v165, 4294901760
    %196 = vmatpush1.msra.mxu0 %v195
    %197 = vmatprep.subr.mxu0 0.0
    %v198 = vand.u32 %v164, 4294901760
    %199 = vmatpush1.msra.mxu0 %v198
    %200 = vmatprep.subr.mxu0 0.0
    %v201 = vand.u32 %v163, 4294901760
    %202 = vmatpush1.msra.mxu0 %v201
    %203 = vmatprep.subr.mxu0 0.0
    %v204 = vand.u32 %v162, 4294901760
    %205 = vmatpush1.msra.mxu0 %v204
    %206 = vmatprep.subr.mxu0 0.0
    %207 = vmatpush2.msra.mxu0 0.0
    %208 = vmatprep.subr.mxu0 0.0
    %209 = vmatpush2.msra.mxu0 0.0
    %210 = vmatprep.subr.mxu0 0.0
    %211 = vmatpush2.msra.mxu0 0.0
    %212 = vmatprep.subr.mxu0 0.0
    %213 = vmatpush2.msra.mxu0 0.0
    %214 = vmatprep.subr.mxu0 0.0
    %215 = vmatpush2.msra.mxu0 0.0
    %216 = vmatprep.subr.mxu0 0.0
    %217 = vmatpush2.msra.mxu0 0.0
    %218 = vmatprep.subr.mxu0 0.0
    %219 = vmatpush2.msra.mxu0 0.0
    %220 = vmatprep.subr.mxu0 0.0
    %221 = vmatpush2.msra.mxu0 0.0
    %222 = vmatprep.subr.mxu0 0.0
    %223 = vmatpush2.msra.mxu0 0.0
    %224 = vmatprep.subr.mxu0 0.0
    %225 = vmatpush2.msra.mxu0 0.0
    %226 = vmatprep.subr.mxu0 0.0
    %227 = vmatpush2.msra.mxu0 0.0
    %228 = vmatprep.subr.mxu0 0.0
    %229 = vmatpush2.msra.mxu0 0.0
    %230 = vmatprep.subr.mxu0 0.0
    %231 = vmatpush2.msra.mxu0 0.0
    %232 = vmatprep.subr.mxu0 0.0
    %233 = vmatpush2.msra.mxu0 0.0
    %234 = vmatprep.subr.mxu0 0.0
    %235 = vmatpush2.msra.mxu0 0.0
    %236 = vmatprep.subr.mxu0 0.0
    %237 = vmatpush2.msra.mxu0 0.0
    %238 = vmatprep.mubr.f32.mxu0 0.0
    %v239 = vand.u32 %v168, 4294901760
    %v240 = vsub.f32 %v168, %v239
    %v241 = vand.u32 %v240, 4294901760
    %v242 = vsub.f32 %v240, %v241
    %v243 = vand.u32 %v242, 4294901760
    %244 = vmatmul.mubr.f32.gmra.mxu0 %v243
    %v245 = vpop.f32.mrf.mxu0
    %v246 = vadd.f32 0.0, %v245
    %v247 = vpop.f32.mrf.mxu0
    %248 = vdwg.mxu0
    %249 = vmatprep.subr.mxu0 0.0
    %250 = vmatpush1.msra.mxu0 0.0
    %251 = vmatprep.subr.mxu0 0.0
    %252 = vmatpush1.msra.mxu0 0.0
    %253 = vmatprep.subr.mxu0 0.0
    %254 = vmatpush1.msra.mxu0 0.0
    %255 = vmatprep.subr.mxu0 0.0
    %256 = vmatpush1.msra.mxu0 0.0
    %257 = vmatprep.subr.mxu0 0.0
    %258 = vmatpush1.msra.mxu0 0.0
    %259 = vmatprep.subr.mxu0 0.0
    %260 = vmatpush1.msra.mxu0 0.0
    %261 = vmatprep.subr.mxu0 0.0
    %262 = vmatpush1.msra.mxu0 0.0
    %263 = vmatprep.subr.mxu0 0.0
    %264 = vmatpush1.msra.mxu0 0.0
    %265 = vmatprep.subr.mxu0 0.0
    %266 = vmatpush1.msra.mxu0 0.0
    %267 = vmatprep.subr.mxu0 0.0
    %268 = vmatpush1.msra.mxu0 0.0
    %269 = vmatprep.subr.mxu0 0.0
    %270 = vmatpush1.msra.mxu0 0.0
    %271 = vmatprep.subr.mxu0 0.0
    %272 = vmatpush1.msra.mxu0 0.0
    %273 = vmatprep.subr.mxu0 0.0
    %v274 = vand.u32 %v165, 4294901760
    %v275 = vsub.f32 %v165, %v274
    %v276 = vand.u32 %v275, 4294901760
    %v277 = vsub.f32 %v275, %v276
    %v278 = vand.u32 %v277, 4294901760
    %279 = vmatpush1.msra.mxu0 %v278
    %280 = vmatprep.subr.mxu0 0.0
    %v281 = vand.u32 %v164, 4294901760
    %v282 = vsub.f32 %v164, %v281
    %v283 = vand.u32 %v282, 4294901760
    %v284 = vsub.f32 %v282, %v283
    %v285 = vand.u32 %v284, 4294901760
    %286 = vmatpush1.msra.mxu0 %v285
    %287 = vmatprep.subr.mxu0 0.0
    %v288 = vand.u32 %v163, 4294901760
    %v289 = vsub.f32 %v163, %v288
    %v290 = vand.u32 %v289, 4294901760
    %v291 = vsub.f32 %v289, %v290
    %v292 = vand.u32 %v291, 4294901760
    %293 = vmatpush1.msra.mxu0 %v292
    %294 = vmatprep.subr.mxu0 0.0
    %v295 = vand.u32 %v162, 4294901760
    %v296 = vsub.f32 %v162, %v295
    %v297 = vand.u32 %v296, 4294901760
    %v298 = vsub.f32 %v296, %v297
    %v299 = vand.u32 %v298, 4294901760
    %300 = vmatpush1.msra.mxu0 %v299
    %301 = vmatprep.subr.mxu0 0.0
    %302 = vmatpush2.msra.mxu0 0.0
    %303 = vmatprep.subr.mxu0 0.0
    %304 = vmatpush2.msra.mxu0 0.0
    %305 = vmatprep.subr.mxu0 0.0
    %306 = vmatpush2.msra.mxu0 0.0
    %307 = vmatprep.subr.mxu0 0.0
    %308 = vmatpush2.msra.mxu0 0.0
    %309 = vmatprep.subr.mxu0 0.0
    %310 = vmatpush2.msra.mxu0 0.0
    %311 = vmatprep.subr.mxu0 0.0
    %312 = vmatpush2.msra.mxu0 0.0
    %313 = vmatprep.subr.mxu0 0.0
    %314 = vmatpush2.msra.mxu0 0.0
    %315 = vmatprep.subr.mxu0 0.0
    %316 = vmatpush2.msra.mxu0 0.0
    %317 = vmatprep.subr.mxu0 0.0
    %318 = vmatpush2.msra.mxu0 0.0
    %319 = vmatprep.subr.mxu0 0.0
    %320 = vmatpush2.msra.mxu0 0.0
    %321 = vmatprep.subr.mxu0 0.0
    %322 = vmatpush2.msra.mxu0 0.0
    %323 = vmatprep.subr.mxu0 0.0
    %324 = vmatpush2.msra.mxu0 0.0
    %325 = vmatprep.subr.mxu0 0.0
    %326 = vmatpush2.msra.mxu0 0.0
    %327 = vmatprep.subr.mxu0 0.0
    %328 = vmatpush2.msra.mxu0 0.0
    %329 = vmatprep.subr.mxu0 0.0
    %330 = vmatpush2.msra.mxu0 0.0
    %331 = vmatprep.subr.mxu0 0.0
    %332 = vmatpush2.msra.mxu0 0.0
    %333 = vmatprep.mubr.f32.mxu0 0.0
    %v334 = vand.u32 %v168, 4294901760
    %335 = vmatmul.mubr.f32.gmra.mxu0 %v334
    %v336 = vpop.f32.mrf.mxu0
    %v337 = vadd.f32 %v246, %v336
    %v338 = vpop.f32.mrf.mxu0
    %339 = vdwg.mxu0
    %340 = vmatprep.subr.mxu0 0.0
    %341 = vmatpush1.msra.mxu0 0.0
    %342 = vmatprep.subr.mxu0 0.0
    %343 = vmatpush1.msra.mxu0 0.0
    %344 = vmatprep.subr.mxu0 0.0
    %345 = vmatpush1.msra.mxu0 0.0
    %346 = vmatprep.subr.mxu0 0.0
    %347 = vmatpush1.msra.mxu0 0.0
    %348 = vmatprep.subr.mxu0 0.0
    %349 = vmatpush1.msra.mxu0 0.0
    %350 = vmatprep.subr.mxu0 0.0
    %351 = vmatpush1.msra.mxu0 0.0
    %352 = vmatprep.subr.mxu0 0.0
    %353 = vmatpush1.msra.mxu0 0.0
    %354 = vmatprep.subr.mxu0 0.0
    %355 = vmatpush1.msra.mxu0 0.0
    %356 = vmatprep.subr.mxu0 0.0
    %357 = vmatpush1.msra.mxu0 0.0
    %358 = vmatprep.subr.mxu0 0.0
    %359 = vmatpush1.msra.mxu0 0.0
    %360 = vmatprep.subr.mxu0 0.0
    %361 = vmatpush1.msra.mxu0 0.0
    %362 = vmatprep.subr.mxu0 0.0
    %363 = vmatpush1.msra.mxu0 0.0
    %364 = vmatprep.subr.mxu0 0.0
    %v365 = vand.u32 %v165, 4294901760
    %v366 = vsub.f32 %v165, %v365
    %367 = vmatpush1.msra.mxu0 %v366
    %368 = vmatprep.subr.mxu0 0.0
    %v369 = vand.u32 %v164, 4294901760
    %v370 = vsub.f32 %v164, %v369
    %371 = vmatpush1.msra.mxu0 %v370
    %372 = vmatprep.subr.mxu0 0.0
    %v373 = vand.u32 %v163, 4294901760
    %v374 = vsub.f32 %v163, %v373
    %375 = vmatpush1.msra.mxu0 %v374
    %376 = vmatprep.subr.mxu0 0.0
    %v377 = vand.u32 %v162, 4294901760
    %v378 = vsub.f32 %v162, %v377
    %379 = vmatpush1.msra.mxu0 %v378
    %380 = vmatprep.subr.mxu0 0.0
    %381 = vmatpush2.msra.mxu0 0.0
    %382 = vmatprep.subr.mxu0 0.0
    %383 = vmatpush2.msra.mxu0 0.0
    %384 = vmatprep.subr.mxu0 0.0
    %385 = vmatpush2.msra.mxu0 0.0
    %386 = vmatprep.subr.mxu0 0.0
    %387 = vmatpush2.msra.mxu0 0.0
    %388 = vmatprep.subr.mxu0 0.0
    %389 = vmatpush2.msra.mxu0 0.0
    %390 = vmatprep.subr.mxu0 0.0
    %391 = vmatpush2.msra.mxu0 0.0
    %392 = vmatprep.subr.mxu0 0.0
    %393 = vmatpush2.msra.mxu0 0.0
    %394 = vmatprep.subr.mxu0 0.0
    %395 = vmatpush2.msra.mxu0 0.0
    %396 = vmatprep.subr.mxu0 0.0
    %397 = vmatpush2.msra.mxu0 0.0
    %398 = vmatprep.subr.mxu0 0.0
    %399 = vmatpush2.msra.mxu0 0.0
    %400 = vmatprep.subr.mxu0 0.0
    %401 = vmatpush2.msra.mxu0 0.0
    %402 = vmatprep.subr.mxu0 0.0
    %403 = vmatpush2.msra.mxu0 0.0
    %404 = vmatprep.subr.mxu0 0.0
    %405 = vmatpush2.msra.mxu0 0.0
    %406 = vmatprep.subr.mxu0 0.0
    %407 = vmatpush2.msra.mxu0 0.0
    %408 = vmatprep.subr.mxu0 0.0
    %409 = vmatpush2.msra.mxu0 0.0
    %410 = vmatprep.subr.mxu0 0.0
    %411 = vmatpush2.msra.mxu0 0.0
    %412 = vmatprep.mubr.f32.mxu0 0.0
    %v413 = vand.u32 %v168, 4294901760
    %v414 = vsub.f32 %v168, %v413
    %415 = vmatmul.mubr.f32.gmra.mxu0 %v414
    %v416 = vpop.f32.mrf.mxu0
    %v417 = vadd.f32 %v337, %v416
    %v418 = vpop.f32.mrf.mxu0
    %419 = vdwg.mxu0
    %420 = vmatprep.subr.mxu0 0.0
    %421 = vmatpush1.msra.mxu0 0.0
    %422 = vmatprep.subr.mxu0 0.0
    %423 = vmatpush1.msra.mxu0 0.0
    %424 = vmatprep.subr.mxu0 0.0
    %425 = vmatpush1.msra.mxu0 0.0
    %426 = vmatprep.subr.mxu0 0.0
    %427 = vmatpush1.msra.mxu0 0.0
    %428 = vmatprep.subr.mxu0 0.0
    %429 = vmatpush1.msra.mxu0 0.0
    %430 = vmatprep.subr.mxu0 0.0
    %431 = vmatpush1.msra.mxu0 0.0
    %432 = vmatprep.subr.mxu0 0.0
    %433 = vmatpush1.msra.mxu0 0.0
    %434 = vmatprep.subr.mxu0 0.0
    %435 = vmatpush1.msra.mxu0 0.0
    %436 = vmatprep.subr.mxu0 0.0
    %437 = vmatpush1.msra.mxu0 0.0
    %438 = vmatprep.subr.mxu0 0.0
    %439 = vmatpush1.msra.mxu0 0.0
    %440 = vmatprep.subr.mxu0 0.0
    %441 = vmatpush1.msra.mxu0 0.0
    %442 = vmatprep.subr.mxu0 0.0
    %443 = vmatpush1.msra.mxu0 0.0
    %444 = vmatprep.subr.mxu0 0.0
    %v445 = vand.u32 %v165, 4294901760
    %446 = vmatpush1.msra.mxu0 %v445
    %447 = vmatprep.subr.mxu0 0.0
    %v448 = vand.u32 %v164, 4294901760
    %449 = vmatpush1.msra.mxu0 %v448
    %450 = vmatprep.subr.mxu0 0.0
    %v451 = vand.u32 %v163, 4294901760
    %452 = vmatpush1.msra.mxu0 %v451
    %453 = vmatprep.subr.mxu0 0.0
    %v454 = vand.u32 %v162, 4294901760
    %455 = vmatpush1.msra.mxu0 %v454
    %456 = vmatprep.subr.mxu0 0.0
    %457 = vmatpush2.msra.mxu0 0.0
    %458 = vmatprep.subr.mxu0 0.0
    %459 = vmatpush2.msra.mxu0 0.0
    %460 = vmatprep.subr.mxu0 0.0
    %461 = vmatpush2.msra.mxu0 0.0
    %462 = vmatprep.subr.mxu0 0.0
    %463 = vmatpush2.msra.mxu0 0.0
    %464 = vmatprep.subr.mxu0 0.0
    %465 = vmatpush2.msra.mxu0 0.0
    %466 = vmatprep.subr.mxu0 0.0
    %467 = vmatpush2.msra.mxu0 0.0
    %468 = vmatprep.subr.mxu0 0.0
    %469 = vmatpush2.msra.mxu0 0.0
    %470 = vmatprep.subr.mxu0 0.0
    %471 = vmatpush2.msra.mxu0 0.0
    %472 = vmatprep.subr.mxu0 0.0
    %473 = vmatpush2.msra.mxu0 0.0
    %474 = vmatprep.subr.mxu0 0.0
    %475 = vmatpush2.msra.mxu0 0.0
    %476 = vmatprep.subr.mxu0 0.0
    %477 = vmatpush2.msra.mxu0 0.0
    %478 = vmatprep.subr.mxu0 0.0
    %479 = vmatpush2.msra.mxu0 0.0
    %480 = vmatprep.subr.mxu0 0.0
    %481 = vmatpush2.msra.mxu0 0.0
    %482 = vmatprep.subr.mxu0 0.0
    %483 = vmatpush2.msra.mxu0 0.0
    %484 = vmatprep.subr.mxu0 0.0
    %485 = vmatpush2.msra.mxu0 0.0
    %486 = vmatprep.subr.mxu0 0.0
    %487 = vmatpush2.msra.mxu0 0.0
    %488 = vmatprep.mubr.f32.mxu0 0.0
    %v489 = vand.u32 %v168, 4294901760
    %v490 = vsub.f32 %v168, %v489
    %v491 = vand.u32 %v490, 4294901760
    %492 = vmatmul.mubr.f32.gmra.mxu0 %v491
    %v493 = vpop.f32.mrf.mxu0
    %v494 = vadd.f32 %v417, %v493
    %v495 = vpop.f32.mrf.mxu0
    %496 = vdwg.mxu0
    %497 = vmatprep.subr.mxu0 0.0
    %498 = vmatpush1.msra.mxu0 0.0
    %499 = vmatprep.subr.mxu0 0.0
    %500 = vmatpush1.msra.mxu0 0.0
    %501 = vmatprep.subr.mxu0 0.0
    %502 = vmatpush1.msra.mxu0 0.0
    %503 = vmatprep.subr.mxu0 0.0
    %504 = vmatpush1.msra.mxu0 0.0
    %505 = vmatprep.subr.mxu0 0.0
    %506 = vmatpush1.msra.mxu0 0.0
    %507 = vmatprep.subr.mxu0 0.0
    %508 = vmatpush1.msra.mxu0 0.0
    %509 = vmatprep.subr.mxu0 0.0
    %510 = vmatpush1.msra.mxu0 0.0
    %511 = vmatprep.subr.mxu0 0.0
    %512 = vmatpush1.msra.mxu0 0.0
    %513 = vmatprep.subr.mxu0 0.0
    %514 = vmatpush1.msra.mxu0 0.0
    %515 = vmatprep.subr.mxu0 0.0
    %516 = vmatpush1.msra.mxu0 0.0
    %517 = vmatprep.subr.mxu0 0.0
    %518 = vmatpush1.msra.mxu0 0.0
    %519 = vmatprep.subr.mxu0 0.0
    %520 = vmatpush1.msra.mxu0 0.0
    %521 = vmatprep.subr.mxu0 0.0
    %v522 = vand.u32 %v165, 4294901760
    %v523 = vsub.f32 %v165, %v522
    %v524 = vand.u32 %v523, 4294901760
    %525 = vmatpush1.msra.mxu0 %v524
    %526 = vmatprep.subr.mxu0 0.0
    %v527 = vand.u32 %v164, 4294901760
    %v528 = vsub.f32 %v164, %v527
    %v529 = vand.u32 %v528, 4294901760
    %530 = vmatpush1.msra.mxu0 %v529
    %531 = vmatprep.subr.mxu0 0.0
    %v532 = vand.u32 %v163, 4294901760
    %v533 = vsub.f32 %v163, %v532
    %v534 = vand.u32 %v533, 4294901760
    %535 = vmatpush1.msra.mxu0 %v534
    %536 = vmatprep.subr.mxu0 0.0
    %v537 = vand.u32 %v162, 4294901760
    %v538 = vsub.f32 %v162, %v537
    %v539 = vand.u32 %v538, 4294901760
    %540 = vmatpush1.msra.mxu0 %v539
    %541 = vmatprep.subr.mxu0 0.0
    %542 = vmatpush2.msra.mxu0 0.0
    %543 = vmatprep.subr.mxu0 0.0
    %544 = vmatpush2.msra.mxu0 0.0
    %545 = vmatprep.subr.mxu0 0.0
    %546 = vmatpush2.msra.mxu0 0.0
    %547 = vmatprep.subr.mxu0 0.0
    %548 = vmatpush2.msra.mxu0 0.0
    %549 = vmatprep.subr.mxu0 0.0
    %550 = vmatpush2.msra.mxu0 0.0
    %551 = vmatprep.subr.mxu0 0.0
    %552 = vmatpush2.msra.mxu0 0.0
    %553 = vmatprep.subr.mxu0 0.0
    %554 = vmatpush2.msra.mxu0 0.0
    %555 = vmatprep.subr.mxu0 0.0
    %556 = vmatpush2.msra.mxu0 0.0
    %557 = vmatprep.subr.mxu0 0.0
    %558 = vmatpush2.msra.mxu0 0.0
    %559 = vmatprep.subr.mxu0 0.0
    %560 = vmatpush2.msra.mxu0 0.0
    %561 = vmatprep.subr.mxu0 0.0
    %562 = vmatpush2.msra.mxu0 0.0
    %563 = vmatprep.subr.mxu0 0.0
    %564 = vmatpush2.msra.mxu0 0.0
    %565 = vmatprep.subr.mxu0 0.0
    %566 = vmatpush2.msra.mxu0 0.0
    %567 = vmatprep.subr.mxu0 0.0
    %568 = vmatpush2.msra.mxu0 0.0
    %569 = vmatprep.subr.mxu0 0.0
    %570 = vmatpush2.msra.mxu0 0.0
    %571 = vmatprep.subr.mxu0 0.0
    %572 = vmatpush2.msra.mxu0 0.0
    %573 = vmatprep.mubr.f32.mxu0 0.0
    %v574 = vand.u32 %v168, 4294901760
    %575 = vmatmul.mubr.f32.gmra.mxu0 %v574
    %v576 = vpop.f32.mrf.mxu0
    %v577 = vadd.f32 %v494, %v576
    %v578 = vpop.f32.mrf.mxu0
    %579 = vdwg.mxu0
    %580 = vmatprep.subr.mxu0 0.0
    %581 = vmatpush1.msra.mxu0 0.0
    %582 = vmatprep.subr.mxu0 0.0
    %583 = vmatpush1.msra.mxu0 0.0
    %584 = vmatprep.subr.mxu0 0.0
    %585 = vmatpush1.msra.mxu0 0.0
    %586 = vmatprep.subr.mxu0 0.0
    %587 = vmatpush1.msra.mxu0 0.0
    %588 = vmatprep.subr.mxu0 0.0
    %589 = vmatpush1.msra.mxu0 0.0
    %590 = vmatprep.subr.mxu0 0.0
    %591 = vmatpush1.msra.mxu0 0.0
    %592 = vmatprep.subr.mxu0 0.0
    %593 = vmatpush1.msra.mxu0 0.0
    %594 = vmatprep.subr.mxu0 0.0
    %595 = vmatpush1.msra.mxu0 0.0
    %596 = vmatprep.subr.mxu0 0.0
    %597 = vmatpush1.msra.mxu0 0.0
    %598 = vmatprep.subr.mxu0 0.0
    %599 = vmatpush1.msra.mxu0 0.0
    %600 = vmatprep.subr.mxu0 0.0
    %601 = vmatpush1.msra.mxu0 0.0
    %602 = vmatprep.subr.mxu0 0.0
    %603 = vmatpush1.msra.mxu0 0.0
    %604 = vmatprep.subr.mxu0 0.0
    %v605 = vand.u32 %v165, 4294901760
    %606 = vmatpush1.msra.mxu0 %v605
    %607 = vmatprep.subr.mxu0 0.0
    %v608 = vand.u32 %v164, 4294901760
    %609 = vmatpush1.msra.mxu0 %v608
    %610 = vmatprep.subr.mxu0 0.0
    %v611 = vand.u32 %v163, 4294901760
    %612 = vmatpush1.msra.mxu0 %v611
    %613 = vmatprep.subr.mxu0 0.0
    %v614 = vand.u32 %v162, 4294901760
    %615 = vmatpush1.msra.mxu0 %v614
    %616 = vmatprep.subr.mxu0 0.0
    %617 = vmatpush2.msra.mxu0 0.0
    %618 = vmatprep.subr.mxu0 0.0
    %619 = vmatpush2.msra.mxu0 0.0
    %620 = vmatprep.subr.mxu0 0.0
    %621 = vmatpush2.msra.mxu0 0.0
    %622 = vmatprep.subr.mxu0 0.0
    %623 = vmatpush2.msra.mxu0 0.0
    %624 = vmatprep.subr.mxu0 0.0
    %625 = vmatpush2.msra.mxu0 0.0
    %626 = vmatprep.subr.mxu0 0.0
    %627 = vmatpush2.msra.mxu0 0.0
    %628 = vmatprep.subr.mxu0 0.0
    %629 = vmatpush2.msra.mxu0 0.0
    %630 = vmatprep.subr.mxu0 0.0
    %631 = vmatpush2.msra.mxu0 0.0
    %632 = vmatprep.subr.mxu0 0.0
    %633 = vmatpush2.msra.mxu0 0.0
    %634 = vmatprep.subr.mxu0 0.0
    %635 = vmatpush2.msra.mxu0 0.0
    %636 = vmatprep.subr.mxu0 0.0
    %637 = vmatpush2.msra.mxu0 0.0
    %638 = vmatprep.subr.mxu0 0.0
    %639 = vmatpush2.msra.mxu0 0.0
    %640 = vmatprep.subr.mxu0 0.0
    %641 = vmatpush2.msra.mxu0 0.0
    %642 = vmatprep.subr.mxu0 0.0
    %643 = vmatpush2.msra.mxu0 0.0
    %644 = vmatprep.subr.mxu0 0.0
    %645 = vmatpush2.msra.mxu0 0.0
    %646 = vmatprep.subr.mxu0 0.0
    %647 = vmatpush2.msra.mxu0 0.0
    %648 = vmatprep.mubr.f32.mxu0 0.0
    %v649 = vand.u32 %v168, 4294901760
    %650 = vmatmul.mubr.f32.gmra.mxu0 %v649
    %v651 = vpop.f32.mrf.mxu0
    %v652 = vadd.f32 %v577, %v651
    %v653 = vpop.f32.mrf.mxu0
    %654 = vdwg.mxu0
    %v655 = vadd.f32 %v161, %v652
    %656 = vst [vmem:[#allocation2] sm:$0xff] %v655
    // Predicated region
    $region22: #{tpu_custom_call.1} parent=1 // pred_check
      %p657 = pneg %p38
    $region23: #{tpu_custom_call.1} parent=1 // pred_check_branch
      %659 = sbr.rel (%p657) target = $region25
    $region24: #{tpu_custom_call.1} parent=1 // pred_region
      %vm660 = vcmp.ne.s32.totalorder %v43, 0
      %v661 = vsel %vm660, 1, 0
      %vm662 = vcmask 130048
      %v663 = vsel %vm662, %v661, 0
      %v664 = vand.u32 %v663, 65535
      %v665 = vshrl.u32 %v663, 16
      %v666 = vcvt.s32.f32 %v664
      %v667 = vcvt.s32.f32 %v665
      %668 = vadd.xlane.f32.xlu0 %v666
      %v669 = vpop.xlane.xlu0 %668
      %670 = vadd.xlane.f32.xlu0 %v667
      %v671 = vpop.xlane.xlu0 %670
      %v672 = vcvt.f32.s32 %v669
      %v673 = vcvt.f32.s32 %v671
      %v674 = vshll.u32 %v673, 16
      %v675 = vadd.s32 %v674, %v672
      %v676 = vcvt.s32.f32 %v675
      %v677 = vld [vmem:[#allocation2] sm:$0xff]
      %v678 = vrcp.pop %v676
      %v679 = vmul.f32 %v677, %v678
      %680 = vst [vmem:[#allocation8] sm:$0xff] %v679
    $region25: #{tpu_custom_call.1} parent=1 // pred_fallthru
      _
    // Predicated region
    $region26: #{tpu_custom_call.1} parent=1 // pred_check
      _
    $region27: #{tpu_custom_call.1} parent=1 // pred_check_branch
      %682 = sbr.rel (0) target = $region29
    $region28: #{tpu_custom_call.1} parent=1 // pred_region
      %s684 = ssub.s32 128, 128
      %685 = vsyncadd [#allocation5], %s684
      %s687 = sshll.u32 [#allocation8], 4
      %s688 = int_to_ptr.vmem [resolvable:$true] %s687
      %690 = dma.vmem_to_hbm [thread:$0]  %s688, 128, %s2, [#allocation5]
    $region29: #{tpu_custom_call.1} parent=1 // pred_fallthru
      _
    // Predicated region
    $region30: #{tpu_custom_call.1} parent=1 // pred_check
      _
    $region31: #{tpu_custom_call.1} parent=1 // pred_check_branch
      %692 = sbr.rel (0) target = $region33
    $region32: #{tpu_custom_call.1} parent=1 // pred_region
      %693 = dma.done [#allocation5], 128
    $region33: #{tpu_custom_call.1} parent=1 // pred_fallthru
      _
    %694 = vsyncpa [#allocation4], 1
    %695 = vsyncpa [#allocation7], 1
    %696 = vsyncpa [#allocation5], 1

</llo_original>
